<compile_context>
chip_gen: v7x
topology: tpu7x:2x2x1
jax: 0.10.0
libtpu: 0.0.40
codegen_flags: <defaults>
</compile_context>

<pallas_src>
import jax
import jax.numpy as jnp
from jax.experimental import pallas as pl
from jax.experimental.pallas import tpu as pltpu

IN_FEATURES = 5
HIDDEN = 8
OUT_FEATURES = 5

# ---------------------------------------------------------------------------
# Packed parameter layout: a single (8, 28) f32 tile (< 1 KiB, one vreg row).
#   p[:8, 0:5]    = w1        (out=8, in=5)        -- features-major kernel
#   p[:8, 5]      = b1 column (8,)
#   p[:5, 6:14]   = w2        (out=5, in=8)
#   p[:5, 14]     = b2 column (5,)
#   p[:5, 15:23]  = w1.T      (in=5, hidden=8)     -- batch-major kernel
#   p[5, 15:23]   = b1 row    (8,)
#   p[6, 15:20]   = b2 row    (5,)
#   p[:8, 23:28]  = w2.T      (hidden=8, out=5)
# ---------------------------------------------------------------------------
_W1_C0 = 0
_B1_C0 = IN_FEATURES                       # 5
_W2_C0 = IN_FEATURES + 1                   # 6
_B2_C0 = IN_FEATURES + 1 + HIDDEN          # 14
_W1T_C0 = _B2_C0 + 1                       # 15
_B1R_ROW = IN_FEATURES                     # row 5 (below w1.T's 5 rows)
_B2R_ROW = IN_FEATURES + 1                 # row 6
_W2T_C0 = _W1T_C0 + HIDDEN                 # 23
_P_COLS = _W2T_C0 + OUT_FEATURES           # 28
_P_ROWS = max(HIDDEN, OUT_FEATURES)        # 8


# ---------------------------------------------------------------------------
# Kernels
# ---------------------------------------------------------------------------
def encoder_kernel_fm(p_ref, x_ref, o_ref):
    """Features-major tile: o^T = W2 @ relu(W1 @ x^T + b1) + b2.

    x_ref: (IN_FEATURES, TB), o_ref: (OUT_FEATURES, TB) -- batch on the lanes,
    so loads and stores are lane-dense / unmasked.
    p_ref: (8, 28) packed parameters, resident across grid steps.
    """
    p = p_ref[...]
    w1 = p[:HIDDEN, _W1_C0:_W1_C0 + IN_FEATURES]            # (8, 5)
    b1 = p[:HIDDEN, _B1_C0:_B1_C0 + 1]                      # (8, 1)
    w2 = p[:OUT_FEATURES, _W2_C0:_W2_C0 + HIDDEN]           # (5, 8)
    b2 = p[:OUT_FEATURES, _B2_C0:_B2_C0 + 1]                # (5, 1)

    x = x_ref[...]                                          # (5, TB)
    h = jnp.dot(w1, x, preferred_element_type=jnp.float32) + b1   # (8, TB) f32
    h = jnp.maximum(h, 0.0)                                 # ReLU in f32 (VPU)
    y = jnp.dot(w2, h, preferred_element_type=jnp.float32) + b2   # (5, TB) f32
    o_ref[...] = y.astype(o_ref.dtype)


def encoder_kernel_bm(p_ref, x_ref, o_ref):
    """Batch-major tile: o = relu(x @ w1.T + b1) @ w2.T + b2.

    x_ref: (TB, IN_FEATURES), o_ref: (TB, OUT_FEATURES).  Uses the transposed
    weights / row-vector biases from the packed tile, so no transposes are
    needed anywhere (neither in the wrapper nor in the kernel).
    """
    p = p_ref[...]
    w1t = p[:IN_FEATURES, _W1T_C0:_W1T_C0 + HIDDEN]                  # (5, 8)
    b1r = p[_B1R_ROW:_B1R_ROW + 1, _W1T_C0:_W1T_C0 + HIDDEN]         # (1, 8)
    w2t = p[:HIDDEN, _W2T_C0:_W2T_C0 + OUT_FEATURES]                 # (8, 5)
    b2r = p[_B2R_ROW:_B2R_ROW + 1, _W1T_C0:_W1T_C0 + OUT_FEATURES]   # (1, 5)

    x = x_ref[...]                                                   # (TB, 5)
    h = jnp.dot(x, w1t, preferred_element_type=jnp.float32) + b1r    # (TB, 8)
    h = jnp.maximum(h, 0.0)
    y = jnp.dot(h, w2t, preferred_element_type=jnp.float32) + b2r    # (TB, 5)
    o_ref[...] = y.astype(o_ref.dtype)


# ---------------------------------------------------------------------------
# Tiling helpers
# ---------------------------------------------------------------------------
def _round_up(n, m):
    return (n + m - 1) // m * m


def _cdiv(a, b):
    return (a + b - 1) // b


def _choose_tiles(batch, block_batch):
    """Pick (tile_batch, n_tiles, padded_batch).

    * Padding waste is bounded (< ~128 cols per tile) by sizing the tile as
      round_up(cdiv(batch, n_tiles), 128) instead of rounding batch up to a
      full tile multiple.
    * On large batches we force >= 2 grid steps so the "parallel" grid axis
      can shard across both v7x TensorCores (a single giant tile would leave
      one TC and its DMA engine idle).
    """
    batch = max(int(batch), 1)
    b128 = _round_up(batch, 128)
    cap = max(_round_up(int(block_batch), 128), 128)
    min_tiles = 2 if b128 >= 4096 else 1
    n_tiles = max(_cdiv(b128, cap), min_tiles)
    n_tiles = min(n_tiles, b128 // 128)       # each tile must be >= 128 lanes
    tb = _round_up(_cdiv(batch, n_tiles), 128)
    return tb, n_tiles, n_tiles * tb


def _cost_estimate(batch, padded, itemsize):
    # 2*(5*8) + 2*(8*5) = 160 flops per batch element; memory-bound hint.
    return pl.CostEstimate(
        flops=2 * batch * (IN_FEATURES * HIDDEN + HIDDEN * OUT_FEATURES),
        transcendentals=0,
        bytes_accessed=(IN_FEATURES + OUT_FEATURES) * padded * itemsize
        + _P_ROWS * _P_COLS * 4,
    )


# ---------------------------------------------------------------------------
# Wrappers
# ---------------------------------------------------------------------------
def encoder_forward_t(x_t, params, *, block_batch=65536):
    """Features-major fast path. x_t: (IN_FEATURES, B) -> (OUT_FEATURES, B).

    Keep activations features-major end-to-end and call this directly for
    peak throughput (lane-dense loads + unmasked stores, no layout copies).
    Per-tile double-buffered VMEM at the default block_batch=65536 is ~8 MiB,
    comfortably within the scoped VMEM default on v5e/v6e/v7x.
    bf16 activations are supported (output dtype follows input dtype) and
    roughly halve HBM traffic on this memory-bound op; accumulation stays f32.
    """
    in_f, batch = x_t.shape
    assert in_f == IN_FEATURES
    tb, n_tiles, padded = _choose_tiles(batch, block_batch)
    if padded != batch:
        x_t = jnp.pad(x_t, ((0, 0), (0, padded - batch)))

    out = pl.pallas_call(
        encoder_kernel_fm,
        out_shape=jax.ShapeDtypeStruct((OUT_FEATURES, padded), x_t.dtype),
        grid=(n_tiles,),
        in_specs=[
            # Packed params: one full-extent block, constant index_map ->
            # DMA'd once, resident in VMEM across all grid steps.
            pl.BlockSpec((_P_ROWS, _P_COLS), lambda i: (0, 0)),
            # Activations: lane-dense batch tiles, software-pipelined.
            pl.BlockSpec((IN_FEATURES, tb), lambda i: (0, i)),
        ],
        out_specs=pl.BlockSpec((OUT_FEATURES, tb), lambda i: (0, i)),
        compiler_params=pltpu.CompilerParams(
            dimension_semantics=("parallel",)),
        cost_estimate=_cost_estimate(batch, padded,
                                     jnp.dtype(x_t.dtype).itemsize),
    )(params, x_t)

    return out[:, :batch] if padded != batch else out


def encoder_forward(x, params, *, block_batch=4096):
    """PyTorch-convention forward. x: (B, 5) -> (B, 5).

    No wrapper-side transposes: the batch-major kernel consumes (tb, 5)
    blocks and writes (tb, 5) blocks directly using transposed weights from
    the packed tile.  Tile cap is smaller here because a (tb, 5) f32 VMEM
    block lane-pads to tb*128*4 bytes; at the default 4096 the footprint is
    ~8 MiB total.  For maximum throughput prefer encoder_forward_t.
    """
    batch, in_f = x.shape
    assert in_f == IN_FEATURES
    tb, n_tiles, padded = _choose_tiles(batch, block_batch)
    if padded != batch:
        x = jnp.pad(x, ((0, padded - batch), (0, 0)))

    out = pl.pallas_call(
        encoder_kernel_bm,
        out_shape=jax.ShapeDtypeStruct((padded, OUT_FEATURES), x.dtype),
        grid=(n_tiles,),
        in_specs=[
            pl.BlockSpec((_P_ROWS, _P_COLS), lambda i: (0, 0)),
            pl.BlockSpec((tb, IN_FEATURES), lambda i: (i, 0)),
        ],
        out_specs=pl.BlockSpec((tb, OUT_FEATURES), lambda i: (i, 0)),
        compiler_params=pltpu.CompilerParams(
            dimension_semantics=("parallel",)),
        cost_estimate=_cost_estimate(batch, padded,
                                     jnp.dtype(x.dtype).itemsize),
    )(params, x)

    return out[:batch] if padded != batch else out


# ---------------------------------------------------------------------------
# Parameters
# ---------------------------------------------------------------------------
def pack_params(w1, b1, w2, b2):
    """Pack PyTorch-layout params (w: (out, in), b: (out,)) into one tile.

    Params stay f32 (tiny, resident in VMEM); on v5e one may additionally
    pre-cast to bf16 if profiling ever shows the MXU as the binding slot.
    """
    p = jnp.zeros((_P_ROWS, _P_COLS), jnp.float32)
    p = p.at[:HIDDEN, _W1_C0:_W1_C0 + IN_FEATURES].set(w1)
    p = p.at[:HIDDEN, _B1_C0].set(b1)
    p = p.at[:OUT_FEATURES, _W2_C0:_W2_C0 + HIDDEN].set(w2)
    p = p.at[:OUT_FEATURES, _B2_C0].set(b2)
    p = p.at[:IN_FEATURES, _W1T_C0:_W1T_C0 + HIDDEN].set(w1.T)
    p = p.at[_B1R_ROW, _W1T_C0:_W1T_C0 + HIDDEN].set(b1)
    p = p.at[_B2R_ROW, _W1T_C0:_W1T_C0 + OUT_FEATURES].set(b2)
    p = p.at[:HIDDEN, _W2T_C0:_W2T_C0 + OUT_FEATURES].set(w2.T)
    return p


def init_params(key):
    """nn.Linear-style init: U(-1/sqrt(fan_in), +1/sqrt(fan_in)); weights (out, in)."""
    k1, k2, k3, k4 = jax.random.split(key, 4)
    bound1 = 1.0 / jnp.sqrt(IN_FEATURES)
    bound2 = 1.0 / jnp.sqrt(HIDDEN)
    w1 = jax.random.uniform(k1, (HIDDEN, IN_FEATURES), jnp.float32, -bound1, bound1)
    b1 = jax.random.uniform(k2, (HIDDEN,), jnp.float32, -bound1, bound1)
    w2 = jax.random.uniform(k3, (OUT_FEATURES, HIDDEN), jnp.float32, -bound2, bound2)
    b2 = jax.random.uniform(k4, (OUT_FEATURES,), jnp.float32, -bound2, bound2)
    return w1, b1, w2, b2


if __name__ == "__main__":
    key = jax.random.PRNGKey(0)
    kx, kx2, kp = jax.random.split(key, 3)

    w1, b1, w2, b2 = init_params(kp)
    params = pack_params(w1, b1, w2, b2)

    def ref_fn(x):
        return jnp.maximum(x @ w1.T + b1, 0.0) @ w2.T + b2

    # Small batch, batch-major PyTorch convention (single grid step, padding).
    x_small = jax.random.normal(kx, (8, IN_FEATURES), jnp.float32)
    out_small = jax.block_until_ready(encoder_forward(x_small, params))
    assert out_small.shape == (8, OUT_FEATURES)
    assert jnp.allclose(out_small, ref_fn(x_small), atol=1e-5, rtol=1e-5)

    # Non-multiple batch, multi-step pipelined grid, features-major fast path.
    x_big = jax.random.normal(kx2, (300, IN_FEATURES), jnp.float32)
    out_big_t = jax.block_until_ready(
        encoder_forward_t(x_big.T, params, block_batch=128))
    assert out_big_t.shape == (OUT_FEATURES, 300)
    assert jnp.allclose(out_big_t.T, ref_fn(x_big), atol=1e-5, rtol=1e-5)

    # Same data through the batch-major kernel (exercises bounded padding
    # and the transposed-weight path, multi-step grid).
    out_big = jax.block_until_ready(
        encoder_forward(x_big, params, block_batch=128))
    assert out_big.shape == (300, OUT_FEATURES)
    assert jnp.allclose(out_big, ref_fn(x_big), atol=1e-5, rtol=1e-5)

    # bf16 activations on the fast path: same kernel, f32 accumulation,
    # ~2x less HBM traffic for this memory-bound op.
    x_bf16 = x_big.astype(jnp.bfloat16)
    out_bf16 = jax.block_until_ready(encoder_forward_t(x_bf16.T, params))
    assert out_bf16.dtype == jnp.bfloat16
    assert jnp.allclose(out_bf16.T.astype(jnp.float32),
                        ref_fn(x_bf16.astype(jnp.float32)),
                        atol=3e-2, rtol=3e-2)

    print("KERNEL_OK")
</pallas_src>

<mosaic_0001>
module attributes {stable_mosaic.version = 11 : i64} {
  func.func @encoder_kernel_bm(%arg0: i32, %arg1: memref<8x28xf32, #tpu.memory_space<vmem>>, %arg2: memref<128x5xf32, #tpu.memory_space<vmem>>, %arg3: memref<128x5xf32, #tpu.memory_space<vmem>>) attributes {dimension_semantics = [#tpu.dimension_semantics<parallel>], iteration_bounds = array<i64: 1>, scalar_prefetch = 0 : i64, scratch_operands = 0 : i64, tpu.core_type = #tpu.core_type<tc>, window_params = [{pipeline_mode = #tpu.pipeline_mode<synchronous>, transform_indices = @transform_0, window_bounds = array<i64: 8, 28>}, {transform_indices = @transform_1, window_bounds = array<i64: 128, 5>}, {transform_indices = @transform_2, window_bounds = array<i64: 128, 5>}]} {
    %c0 = arith.constant 0 : index
    %c0_0 = arith.constant 0 : index
    %0 = vector.load %arg1[%c0, %c0_0] : memref<8x28xf32, #tpu.memory_space<vmem>>, vector<8x28xf32>
    %1 = vector.extract_strided_slice %0 {offsets = [0, 15], sizes = [5, 8], strides = [1, 1]} : vector<8x28xf32> to vector<5x8xf32>
    %2 = vector.extract_strided_slice %0 {offsets = [5, 15], sizes = [1, 8], strides = [1, 1]} : vector<8x28xf32> to vector<1x8xf32>
    %3 = vector.extract_strided_slice %0 {offsets = [0, 23], sizes = [8, 5], strides = [1, 1]} : vector<8x28xf32> to vector<8x5xf32>
    %4 = vector.extract_strided_slice %0 {offsets = [6, 15], sizes = [1, 5], strides = [1, 1]} : vector<8x28xf32> to vector<1x5xf32>
    %c0_1 = arith.constant 0 : index
    %c0_2 = arith.constant 0 : index
    %5 = vector.load %arg2[%c0_1, %c0_2] : memref<128x5xf32, #tpu.memory_space<vmem>>, vector<128x5xf32>
    %cst = arith.constant dense<0.000000e+00> : vector<128x8xf32>
    %6 = tpu.matmul %5, %1, %cst {dimension_numbers = #tpu.dot_dimension_numbers<[1], [0], [0], [1], [0, 0, 1, 1], [], []>} : vector<128x5xf32>, vector<5x8xf32>, vector<128x8xf32> -> vector<128x8xf32>
    %7 = vector.broadcast %2 : vector<1x8xf32> to vector<128x8xf32>
    %8 = arith.addf %6, %7 : vector<128x8xf32>
    %cst_3 = arith.constant 0.000000e+00 : f32
    %9 = vector.broadcast %cst_3 : f32 to vector<128x8xf32>
    %10 = arith.maximumf %8, %9 : vector<128x8xf32>
    %cst_4 = arith.constant dense<0.000000e+00> : vector<128x5xf32>
    %11 = tpu.matmul %10, %3, %cst_4 {dimension_numbers = #tpu.dot_dimension_numbers<[1], [0], [0], [1], [0, 0, 1, 1], [], []>} : vector<128x8xf32>, vector<8x5xf32>, vector<128x5xf32> -> vector<128x5xf32>
    %12 = vector.broadcast %4 : vector<1x5xf32> to vector<128x5xf32>
    %13 = arith.addf %11, %12 : vector<128x5xf32>
    %c0_5 = arith.constant 0 : index
    %c0_6 = arith.constant 0 : index
    %14 = vector.load %arg3[%c0_5, %c0_6] : memref<128x5xf32, #tpu.memory_space<vmem>>, vector<128x5xf32>
    tpu.vector_store %arg3[%c0_5, %c0_6], %13 {strides = array<i32>} : memref<128x5xf32, #tpu.memory_space<vmem>>, vector<128x5xf32>,
    return
  }
  func.func @transform_0(%arg0: i32) -> (i32, i32) {
    %c0_i32 = arith.constant 0 : i32
    %c0_i32_0 = arith.constant 0 : i32
    %c0_i32_1 = arith.constant 0 : i32
    return %c0_i32, %c0_i32_0 : i32, i32
  }
  func.func @transform_1(%arg0: i32) -> (i32, i32) {
    %c0_i32 = arith.constant 0 : i32
    %c0_i32_0 = arith.constant 0 : i32
    return %arg0, %c0_i32 : i32, i32
  }
  func.func @transform_2(%arg0: i32) -> (i32, i32) {
    %c0_i32 = arith.constant 0 : i32
    %c0_i32_0 = arith.constant 0 : i32
    return %arg0, %c0_i32 : i32, i32
  }
}

</mosaic_0001>

<llo_original>
// kernel: tpu_custom_call.1
$region0: #{tpu_custom_call.1}
  #allocation0 [shape = 'u32[]', space=smem, size = 0x4, offset = 0x4, fixed_abs, tag = 'smem constant byte address 0x4 - core index']
  #allocation1 [shape = 'u32[144,128]{1,0:T(1,128)}', space=vmem, size = 0x12000, scoped, tag = 'internal scratch']
  %s0 = inlined_call_operand.vmem [shape: f32[8,28], index: 0, kind: input, shape index: {}]
  %s1 = inlined_call_operand.vmem [shape: f32[128,5], index: 1, kind: input, shape index: {}]
  %s2 = inlined_call_operand.vmem [shape: f32[128,5], index: 2, kind: output, shape index: {}]
  %s3 = sld [smem:[#allocation0]]
  $region18: #{tpu_custom_call.1} parent=0
    _
  %s5 = ssub.s32 1, %s3
  %s6 = scalar_select 0, %s5, %s3
  // Predicated region
  $region2: #{tpu_custom_call.1} parent=0 // pred_check
    _
  $region3: #{tpu_custom_call.1} parent=0 // pred_check_branch
    %8 = sbr.rel (0) target = $region5
  $region4: #{tpu_custom_call.1} parent=0 // pred_region
    _
  $region5: #{tpu_custom_call.1} parent=0 // pred_fallthru
    _
  // Predicated region
  $region6: #{tpu_custom_call.1} parent=0 // pred_check
    _
  $region7: #{tpu_custom_call.1} parent=0 // pred_check_branch
    %10 = sbr.rel (0) target = $region9
  $region8: #{tpu_custom_call.1} parent=0 // pred_region
    _
  $region9: #{tpu_custom_call.1} parent=0 // pred_fallthru
    _
  %v11 = vld [vmem:[%s0] sm:$0xff]
  %v12 = vld [vmem:[%s1] sm:$0xff]
  %v13 = vld [vmem:[%s1 + $0x8] sm:$0xff]
  %v14 = vld [vmem:[%s1 + $0x10] sm:$0xff]
  %v15 = vld [vmem:[%s1 + $0x18] sm:$0xff]
  %v16 = vld [vmem:[%s1 + $0x20] sm:$0xff]
  %v17 = vld [vmem:[%s1 + $0x28] sm:$0xff]
  %v18 = vld [vmem:[%s1 + $0x30] sm:$0xff]
  %v19 = vld [vmem:[%s1 + $0x38] sm:$0xff]
  %v20 = vld [vmem:[%s1 + $0x40] sm:$0xff]
  %v21 = vld [vmem:[%s1 + $0x48] sm:$0xff]
  %v22 = vld [vmem:[%s1 + $0x50] sm:$0xff]
  %v23 = vld [vmem:[%s1 + $0x58] sm:$0xff]
  %v24 = vld [vmem:[%s1 + $0x60] sm:$0xff]
  %v25 = vld [vmem:[%s1 + $0x68] sm:$0xff]
  %v26 = vld [vmem:[%s1 + $0x70] sm:$0xff]
  %v27 = vld [vmem:[%s1 + $0x78] sm:$0xff]
  %v28 = vlaneseq
  %v29 = vshrl.u32 %v28, 7
  %v30 = vsub.s32 5, %v29
  %v31 = vrot.slane %v11, %v30
  %33 = vrot.lane.b32.xlu0 %v11, 113
  %v34 = vpop.permute.xlu0 %33
  %36 = vrot.lane.b32.xlu0 %v31, 113
  %v37 = vpop.permute.xlu0 %36
  %vm39 = vcmask 39936
  %v41 = vsel %vm39, %v12, 0
  %v44 = vsel %vm39, %v13, 0
  %v47 = vsel %vm39, %v14, 0
  %v50 = vsel %vm39, %v15, 0
  %v53 = vsel %vm39, %v16, 0
  %v56 = vsel %vm39, %v17, 0
  %v59 = vsel %vm39, %v18, 0
  %v62 = vsel %vm39, %v19, 0
  %v65 = vsel %vm39, %v20, 0
  %v68 = vsel %vm39, %v21, 0
  %v71 = vsel %vm39, %v22, 0
  %v74 = vsel %vm39, %v23, 0
  %v77 = vsel %vm39, %v24, 0
  %v80 = vsel %vm39, %v25, 0
  %v83 = vsel %vm39, %v26, 0
  %v86 = vsel %vm39, %v27, 0
  %vm88 = vcmask 1044480
  %v89 = vsel %vm88, %v34, 0
  %91 = vmatprep.subr.mxu0 0.0
  %92 = vmatpush1.msra.mxu0 %v89
  %93 = vmatprep.subr.mxu0 0.0
  %94 = vmatpush1.msra.mxu0 0.0
  %95 = vmatprep.subr.mxu0 0.0
  %96 = vmatpush1.msra.mxu0 0.0
  %97 = vmatprep.subr.mxu0 0.0
  %98 = vmatpush1.msra.mxu0 0.0
  %99 = vmatprep.subr.mxu0 0.0
  %100 = vmatpush1.msra.mxu0 0.0
  %101 = vmatprep.subr.mxu0 0.0
  %102 = vmatpush1.msra.mxu0 0.0
  %103 = vmatprep.subr.mxu0 0.0
  %104 = vmatpush1.msra.mxu0 0.0
  %105 = vmatprep.subr.mxu0 0.0
  %106 = vmatpush1.msra.mxu0 0.0
  %107 = vmatprep.subr.mxu0 0.0
  %108 = vmatpush1.msra.mxu0 0.0
  %109 = vmatprep.subr.mxu0 0.0
  %110 = vmatpush1.msra.mxu0 0.0
  %111 = vmatprep.subr.mxu0 0.0
  %112 = vmatpush1.msra.mxu0 0.0
  %113 = vmatprep.subr.mxu0 0.0
  %114 = vmatpush1.msra.mxu0 0.0
  %115 = vmatprep.subr.mxu0 0.0
  %116 = vmatpush1.msra.mxu0 0.0
  %117 = vmatprep.subr.mxu0 0.0
  %118 = vmatpush1.msra.mxu0 0.0
  %119 = vmatprep.subr.mxu0 0.0
  %120 = vmatpush1.msra.mxu0 0.0
  %121 = vmatprep.subr.mxu0 0.0
  %122 = vmatpush1.msra.mxu0 0.0
  %123 = vmatprep.subr.mxu0 0.0
  %124 = vmatpush1.msra.mxu0 0.0
  %125 = vmatprep.subr.mxu0 0.0
  %126 = vmatpush1.msra.mxu0 0.0
  %127 = vmatprep.subr.mxu0 0.0
  %128 = vmatpush1.msra.mxu0 0.0
  %129 = vmatprep.subr.mxu0 0.0
  %130 = vmatpush1.msra.mxu0 0.0
  %131 = vmatprep.subr.mxu0 0.0
  %132 = vmatpush1.msra.mxu0 0.0
  %133 = vmatprep.subr.mxu0 0.0
  %134 = vmatpush1.msra.mxu0 0.0
  %135 = vmatprep.subr.mxu0 0.0
  %136 = vmatpush1.msra.mxu0 0.0
  %137 = vmatprep.subr.mxu0 0.0
  %138 = vmatpush1.msra.mxu0 0.0
  %139 = vmatprep.subr.mxu0 0.0
  %140 = vmatpush1.msra.mxu0 0.0
  %141 = vmatprep.subr.mxu0 0.0
  %142 = vmatpush1.msra.mxu0 0.0
  %143 = vmatprep.subr.mxu0 0.0
  %144 = vmatpush1.msra.mxu0 0.0
  %145 = vmatprep.subr.mxu0 0.0
  %146 = vmatpush1.msra.mxu0 0.0
  %147 = vmatprep.subr.mxu0 0.0
  %148 = vmatpush1.msra.mxu0 0.0
  %149 = vmatprep.subr.mxu0 0.0
  %150 = vmatpush1.msra.mxu0 0.0
  %151 = vmatprep.subr.mxu0 0.0
  %152 = vmatpush1.msra.mxu0 0.0
  %153 = vmatprep.subr.mxu0 0.0
  %154 = vmatpush1.msra.mxu0 0.0
  %155 = vmatprep.mubr.f32.mxu0 0.0
  %156 = vmatmul.mubr.f32.gmra.mrb[0].mxu0 %v41
  %v157 = vpop.f32.mrb[0].mxu0
  %v158 = vadd.f32 %v37, %v157
  %v159 = vpop.f32.mrb[0].mxu0
  %160 = vmatprep.mubr.f32.mxu0 0.0
  %161 = vmatmul.mubr.f32.gmra.mrb[0].mxu0 %v44
  %v162 = vpop.f32.mrb[0].mxu0
  %v163 = vadd.f32 %v37, %v162
  %v164 = vpop.f32.mrb[0].mxu0
  %165 = vmatprep.mubr.f32.mxu0 0.0
  %166 = vmatmul.mubr.f32.gmra.mrb[0].mxu0 %v47
  %v167 = vpop.f32.mrb[0].mxu0
  %v168 = vadd.f32 %v37, %v167
  %v169 = vpop.f32.mrb[0].mxu0
  %170 = vmatprep.mubr.f32.mxu0 0.0
  %171 = vmatmul.mubr.f32.gmra.mrb[0].mxu0 %v50
  %v172 = vpop.f32.mrb[0].mxu0
  %v173 = vadd.f32 %v37, %v172
  %v174 = vpop.f32.mrb[0].mxu0
  %175 = vmatprep.mubr.f32.mxu0 0.0
  %176 = vmatmul.mubr.f32.gmra.mrb[0].mxu0 %v53
  %v177 = vpop.f32.mrb[0].mxu0
  %v178 = vadd.f32 %v37, %v177
  %v179 = vpop.f32.mrb[0].mxu0
  %180 = vmatprep.mubr.f32.mxu0 0.0
  %181 = vmatmul.mubr.f32.gmra.mrb[0].mxu0 %v56
  %v182 = vpop.f32.mrb[0].mxu0
  %v183 = vadd.f32 %v37, %v182
  %v184 = vpop.f32.mrb[0].mxu0
  %185 = vmatprep.mubr.f32.mxu0 0.0
  %186 = vmatmul.mubr.f32.gmra.mrb[0].mxu0 %v59
  %v187 = vpop.f32.mrb[0].mxu0
  %v188 = vadd.f32 %v37, %v187
  %v189 = vpop.f32.mrb[0].mxu0
  %190 = vmatprep.mubr.f32.mxu0 0.0
  %191 = vmatmul.mubr.f32.gmra.mrb[0].mxu0 %v62
  %v192 = vpop.f32.mrb[0].mxu0
  %v193 = vadd.f32 %v37, %v192
  %v194 = vpop.f32.mrb[0].mxu0
  %195 = vmatprep.mubr.f32.mxu0 0.0
  %196 = vmatmul.mubr.f32.gmra.mrb[0].mxu0 %v65
  %v197 = vpop.f32.mrb[0].mxu0
  %v198 = vadd.f32 %v37, %v197
  %v199 = vpop.f32.mrb[0].mxu0
  %200 = vmatprep.mubr.f32.mxu0 0.0
  %201 = vmatmul.mubr.f32.gmra.mrb[0].mxu0 %v68
  %v202 = vpop.f32.mrb[0].mxu0
  %v203 = vadd.f32 %v37, %v202
  %v204 = vpop.f32.mrb[0].mxu0
  %205 = vmatprep.mubr.f32.mxu0 0.0
  %206 = vmatmul.mubr.f32.gmra.mrb[0].mxu0 %v71
  %v207 = vpop.f32.mrb[0].mxu0
  %v208 = vadd.f32 %v37, %v207
  %v209 = vpop.f32.mrb[0].mxu0
  %210 = vmatprep.mubr.f32.mxu0 0.0
  %211 = vmatmul.mubr.f32.gmra.mrb[0].mxu0 %v74
  %v212 = vpop.f32.mrb[0].mxu0
  %v213 = vadd.f32 %v37, %v212
  %v214 = vpop.f32.mrb[0].mxu0
  %215 = vmatprep.mubr.f32.mxu0 0.0
  %216 = vmatmul.mubr.f32.gmra.mrb[0].mxu0 %v77
  %v217 = vpop.f32.mrb[0].mxu0
  %v218 = vadd.f32 %v37, %v217
  %v219 = vpop.f32.mrb[0].mxu0
  %220 = vmatprep.mubr.f32.mxu0 0.0
  %221 = vmatmul.mubr.f32.gmra.mrb[0].mxu0 %v80
  %v222 = vpop.f32.mrb[0].mxu0
  %v223 = vadd.f32 %v37, %v222
  %v224 = vpop.f32.mrb[0].mxu0
  %225 = vmatprep.mubr.f32.mxu0 0.0
  %226 = vmatmul.mubr.f32.gmra.mrb[0].mxu0 %v83
  %v227 = vpop.f32.mrb[0].mxu0
  %v228 = vadd.f32 %v37, %v227
  %v229 = vpop.f32.mrb[0].mxu0
  %230 = vmatprep.mubr.f32.mxu0 0.0
  %231 = vmatmul.mubr.f32.gmra.mrb[0].mxu0 %v86
  %v232 = vpop.f32.mrb[0].mxu0
  %v233 = vadd.f32 %v37, %v232
  %v234 = vpop.f32.mrb[0].mxu0
  %235 = vdwg.mxu0
  %v236 = vmax.f32 %v158, 0.0
  %v237 = vmax.f32 %v163, 0.0
  %v238 = vmax.f32 %v168, 0.0
  %v239 = vmax.f32 %v173, 0.0
  %v240 = vmax.f32 %v178, 0.0
  %v241 = vmax.f32 %v183, 0.0
  %v242 = vmax.f32 %v188, 0.0
  %v243 = vmax.f32 %v193, 0.0
  %v244 = vmax.f32 %v198, 0.0
  %v245 = vmax.f32 %v203, 0.0
  %v246 = vmax.f32 %v208, 0.0
  %v247 = vmax.f32 %v213, 0.0
  %v248 = vmax.f32 %v218, 0.0
  %v249 = vmax.f32 %v223, 0.0
  %v250 = vmax.f32 %v228, 0.0
  %v251 = vmax.f32 %v233, 0.0
  %v252 = vlaneseq
  %v253 = vshrl.u32 %v252, 7
  %v254 = vsub.s32 6, %v253
  %v255 = vrot.slane %v11, %v254
  %256 = vrot.lane.b32.xlu0 %v11, 105
  %v257 = vpop.permute.xlu0 %256
  %260 = vrot.lane.b32.xlu0 %v255, 113
  %v261 = vpop.permute.xlu0 %260
  %vm263 = vcmask 64512
  %v265 = vsel %vm263, %v236, 0
  %v268 = vsel %vm263, %v237, 0
  %v271 = vsel %vm263, %v238, 0
  %v274 = vsel %vm263, %v239, 0
  %v277 = vsel %vm263, %v240, 0
  %v280 = vsel %vm263, %v241, 0
  %v283 = vsel %vm263, %v242, 0
  %v286 = vsel %vm263, %v243, 0
  %v289 = vsel %vm263, %v244, 0
  %v292 = vsel %vm263, %v245, 0
  %v295 = vsel %vm263, %v246, 0
  %v298 = vsel %vm263, %v247, 0
  %v301 = vsel %vm263, %v248, 0
  %v304 = vsel %vm263, %v249, 0
  %v307 = vsel %vm263, %v250, 0
  %v310 = vsel %vm263, %v251, 0
  %312 = vmatprep.subr.mxu0 0.0
  %313 = vmatpush1.msra.mxu0 %v257
  %314 = vmatprep.subr.mxu0 0.0
  %315 = vmatpush1.msra.mxu0 0.0
  %316 = vmatprep.subr.mxu0 0.0
  %317 = vmatpush1.msra.mxu0 0.0
  %318 = vmatprep.subr.mxu0 0.0
  %319 = vmatpush1.msra.mxu0 0.0
  %320 = vmatprep.subr.mxu0 0.0
  %321 = vmatpush1.msra.mxu0 0.0
  %322 = vmatprep.subr.mxu0 0.0
  %323 = vmatpush1.msra.mxu0 0.0
  %324 = vmatprep.subr.mxu0 0.0
  %325 = vmatpush1.msra.mxu0 0.0
  %326 = vmatprep.subr.mxu0 0.0
  %327 = vmatpush1.msra.mxu0 0.0
  %328 = vmatprep.subr.mxu0 0.0
  %329 = vmatpush1.msra.mxu0 0.0
  %330 = vmatprep.subr.mxu0 0.0
  %331 = vmatpush1.msra.mxu0 0.0
  %332 = vmatprep.subr.mxu0 0.0
  %333 = vmatpush1.msra.mxu0 0.0
  %334 = vmatprep.subr.mxu0 0.0
  %335 = vmatpush1.msra.mxu0 0.0
  %336 = vmatprep.subr.mxu0 0.0
  %337 = vmatpush1.msra.mxu0 0.0
  %338 = vmatprep.subr.mxu0 0.0
  %339 = vmatpush1.msra.mxu0 0.0
  %340 = vmatprep.subr.mxu0 0.0
  %341 = vmatpush1.msra.mxu0 0.0
  %342 = vmatprep.subr.mxu0 0.0
  %343 = vmatpush1.msra.mxu0 0.0
  %344 = vmatprep.subr.mxu0 0.0
  %345 = vmatpush1.msra.mxu0 0.0
  %346 = vmatprep.subr.mxu0 0.0
  %347 = vmatpush1.msra.mxu0 0.0
  %348 = vmatprep.subr.mxu0 0.0
  %349 = vmatpush1.msra.mxu0 0.0
  %350 = vmatprep.subr.mxu0 0.0
  %351 = vmatpush1.msra.mxu0 0.0
  %352 = vmatprep.subr.mxu0 0.0
  %353 = vmatpush1.msra.mxu0 0.0
  %354 = vmatprep.subr.mxu0 0.0
  %355 = vmatpush1.msra.mxu0 0.0
  %356 = vmatprep.subr.mxu0 0.0
  %357 = vmatpush1.msra.mxu0 0.0
  %358 = vmatprep.subr.mxu0 0.0
  %359 = vmatpush1.msra.mxu0 0.0
  %360 = vmatprep.subr.mxu0 0.0
  %361 = vmatpush1.msra.mxu0 0.0
  %362 = vmatprep.subr.mxu0 0.0
  %363 = vmatpush1.msra.mxu0 0.0
  %364 = vmatprep.subr.mxu0 0.0
  %365 = vmatpush1.msra.mxu0 0.0
  %366 = vmatprep.subr.mxu0 0.0
  %367 = vmatpush1.msra.mxu0 0.0
  %368 = vmatprep.subr.mxu0 0.0
  %369 = vmatpush1.msra.mxu0 0.0
  %370 = vmatprep.subr.mxu0 0.0
  %371 = vmatpush1.msra.mxu0 0.0
  %372 = vmatprep.subr.mxu0 0.0
  %373 = vmatpush1.msra.mxu0 0.0
  %374 = vmatprep.subr.mxu0 0.0
  %375 = vmatpush1.msra.mxu0 0.0
  %376 = vmatprep.mubr.f32.mxu0 0.0
  %377 = vmatmul.mubr.f32.gmra.mrb[0].mxu0 %v265
  %v378 = vpop.f32.mrb[0].mxu0
  %v379 = vadd.f32 %v261, %v378
  %v380 = vpop.f32.mrb[0].mxu0
  %381 = vmatprep.mubr.f32.mxu0 0.0
  %382 = vmatmul.mubr.f32.gmra.mrb[0].mxu0 %v268
  %v383 = vpop.f32.mrb[0].mxu0
  %v384 = vadd.f32 %v261, %v383
  %v385 = vpop.f32.mrb[0].mxu0
  %386 = vmatprep.mubr.f32.mxu0 0.0
  %387 = vmatmul.mubr.f32.gmra.mrb[0].mxu0 %v271
  %v388 = vpop.f32.mrb[0].mxu0
  %v389 = vadd.f32 %v261, %v388
  %v390 = vpop.f32.mrb[0].mxu0
  %391 = vmatprep.mubr.f32.mxu0 0.0
  %392 = vmatmul.mubr.f32.gmra.mrb[0].mxu0 %v274
  %v393 = vpop.f32.mrb[0].mxu0
  %v394 = vadd.f32 %v261, %v393
  %v395 = vpop.f32.mrb[0].mxu0
  %396 = vmatprep.mubr.f32.mxu0 0.0
  %397 = vmatmul.mubr.f32.gmra.mrb[0].mxu0 %v277
  %v398 = vpop.f32.mrb[0].mxu0
  %v399 = vadd.f32 %v261, %v398
  %v400 = vpop.f32.mrb[0].mxu0
  %401 = vmatprep.mubr.f32.mxu0 0.0
  %402 = vmatmul.mubr.f32.gmra.mrb[0].mxu0 %v280
  %v403 = vpop.f32.mrb[0].mxu0
  %v404 = vadd.f32 %v261, %v403
  %v405 = vpop.f32.mrb[0].mxu0
  %406 = vmatprep.mubr.f32.mxu0 0.0
  %407 = vmatmul.mubr.f32.gmra.mrb[0].mxu0 %v283
  %v408 = vpop.f32.mrb[0].mxu0
  %v409 = vadd.f32 %v261, %v408
  %v410 = vpop.f32.mrb[0].mxu0
  %411 = vmatprep.mubr.f32.mxu0 0.0
  %412 = vmatmul.mubr.f32.gmra.mrb[0].mxu0 %v286
  %v413 = vpop.f32.mrb[0].mxu0
  %v414 = vadd.f32 %v261, %v413
  %v415 = vpop.f32.mrb[0].mxu0
  %416 = vmatprep.mubr.f32.mxu0 0.0
  %417 = vmatmul.mubr.f32.gmra.mrb[0].mxu0 %v289
  %v418 = vpop.f32.mrb[0].mxu0
  %v419 = vadd.f32 %v261, %v418
  %v420 = vpop.f32.mrb[0].mxu0
  %421 = vmatprep.mubr.f32.mxu0 0.0
  %422 = vmatmul.mubr.f32.gmra.mrb[0].mxu0 %v292
  %v423 = vpop.f32.mrb[0].mxu0
  %v424 = vadd.f32 %v261, %v423
  %v425 = vpop.f32.mrb[0].mxu0
  %426 = vmatprep.mubr.f32.mxu0 0.0
  %427 = vmatmul.mubr.f32.gmra.mrb[0].mxu0 %v295
  %v428 = vpop.f32.mrb[0].mxu0
  %v429 = vadd.f32 %v261, %v428
  %v430 = vpop.f32.mrb[0].mxu0
  %431 = vmatprep.mubr.f32.mxu0 0.0
  %432 = vmatmul.mubr.f32.gmra.mrb[0].mxu0 %v298
  %v433 = vpop.f32.mrb[0].mxu0
  %v434 = vadd.f32 %v261, %v433
  %v435 = vpop.f32.mrb[0].mxu0
  %436 = vmatprep.mubr.f32.mxu0 0.0
  %437 = vmatmul.mubr.f32.gmra.mrb[0].mxu0 %v301
  %v438 = vpop.f32.mrb[0].mxu0
  %v439 = vadd.f32 %v261, %v438
  %v440 = vpop.f32.mrb[0].mxu0
  %441 = vmatprep.mubr.f32.mxu0 0.0
  %442 = vmatmul.mubr.f32.gmra.mrb[0].mxu0 %v304
  %v443 = vpop.f32.mrb[0].mxu0
  %v444 = vadd.f32 %v261, %v443
  %v445 = vpop.f32.mrb[0].mxu0
  %446 = vmatprep.mubr.f32.mxu0 0.0
  %447 = vmatmul.mubr.f32.gmra.mrb[0].mxu0 %v307
  %v448 = vpop.f32.mrb[0].mxu0
  %v449 = vadd.f32 %v261, %v448
  %v450 = vpop.f32.mrb[0].mxu0
  %451 = vmatprep.mubr.f32.mxu0 0.0
  %452 = vmatmul.mubr.f32.gmra.mrb[0].mxu0 %v310
  %v453 = vpop.f32.mrb[0].mxu0
  %v454 = vadd.f32 %v261, %v453
  %v455 = vpop.f32.mrb[0].mxu0
  %456 = vdwg.mxu0
  %457 = vst.msk [vmem:[%s2] sm:$0xff] %vm39, %v379
  %458 = vst.msk [vmem:[%s2 + $0x8] sm:$0xff] %vm39, %v384
  %459 = vst.msk [vmem:[%s2 + $0x10] sm:$0xff] %vm39, %v389
  %460 = vst.msk [vmem:[%s2 + $0x18] sm:$0xff] %vm39, %v394
  %461 = vst.msk [vmem:[%s2 + $0x20] sm:$0xff] %vm39, %v399
  %462 = vst.msk [vmem:[%s2 + $0x28] sm:$0xff] %vm39, %v404
  %463 = vst.msk [vmem:[%s2 + $0x30] sm:$0xff] %vm39, %v409
  %464 = vst.msk [vmem:[%s2 + $0x38] sm:$0xff] %vm39, %v414
  %465 = vst.msk [vmem:[%s2 + $0x40] sm:$0xff] %vm39, %v419
  %466 = vst.msk [vmem:[%s2 + $0x48] sm:$0xff] %vm39, %v424
  %467 = vst.msk [vmem:[%s2 + $0x50] sm:$0xff] %vm39, %v429
  %468 = vst.msk [vmem:[%s2 + $0x58] sm:$0xff] %vm39, %v434
  %469 = vst.msk [vmem:[%s2 + $0x60] sm:$0xff] %vm39, %v439
  %470 = vst.msk [vmem:[%s2 + $0x68] sm:$0xff] %vm39, %v444
  %471 = vst.msk [vmem:[%s2 + $0x70] sm:$0xff] %vm39, %v449
  %472 = vst.msk [vmem:[%s2 + $0x78] sm:$0xff] %vm39, %v454
  // Predicated region
  $region10: #{tpu_custom_call.1} parent=0 // pred_check
    _
  $region11: #{tpu_custom_call.1} parent=0 // pred_check_branch
    %474 = sbr.rel (0) target = $region13
  $region12: #{tpu_custom_call.1} parent=0 // pred_region
    _
  $region13: #{tpu_custom_call.1} parent=0 // pred_fallthru
    _
  // Predicated region
  $region14: #{tpu_custom_call.1} parent=0 // pred_check
    _
  $region15: #{tpu_custom_call.1} parent=0 // pred_check_branch
    %476 = sbr.rel (0) target = $region17
  $region16: #{tpu_custom_call.1} parent=0 // pred_region
    _
  $region17: #{tpu_custom_call.1} parent=0 // pred_fallthru
    _

</llo_original>
